<compile_context>
chip_gen: v5e
topology: v5e:2x2
jax: 0.10.0
libtpu: 0.0.40
codegen_flags: <defaults>
</compile_context>

<pallas_src>
import functools
import math

import jax
import jax.numpy as jnp
import numpy as np
from jax.experimental import pallas as pl
from jax.experimental.pallas import tpu as pltpu


def _round_up(v, m):
    return ((v + m - 1) // m) * m


def _drop_path_kernel(x_ref, s_ref, o_ref, *, tm):
    """Per-row scale of a lane-dense slab.

    x_ref : [tm, nc]     flattened sample rows (streamed)
    s_ref : [R_pad, 1]   per-row scale (0.0 or 1/keep_prob), f32, VMEM-resident
    o_ref : [tm, nc]
    """
    i = pl.program_id(0)
    start = pl.multiple_of(i * tm, tm)
    s = s_ref[pl.ds(start, tm), :]                       # (tm, 1) f32
    # Multiply in the input dtype (no f32 upcast of x); cast scale once.
    o_ref[...] = x_ref[...] * s.astype(o_ref.dtype)


def drop_path(x, drop_prob: float = 0.0, *, training: bool = False, key=None,
              target_block_bytes: int = 2 * 1024 * 1024):
    """DropPath forward matching the PyTorch module (batch dim first)."""
    if drop_prob == 0.0 or not training:
        return x
    if key is None:
        raise ValueError("drop_path needs a PRNG key when training with drop_prob > 0")

    keep_prob = 1.0 - drop_prob
    orig_shape = x.shape
    B = orig_shape[0]
    N = int(np.prod(orig_shape[1:])) if len(orig_shape) > 1 else 1

    # Per-sample keep mask, same construction as torch: floor(keep_prob + U[0,1)).
    # The 1/keep_prob factor is folded in here so the kernel is one multiply
    # per element.
    u = jax.random.uniform(key, (B,), dtype=jnp.float32)
    scale = jnp.floor(keep_prob + u) / keep_prob          # (B,) 0.0 or 1/keep_prob

    itemsize = jnp.dtype(x.dtype).itemsize
    sub = {4: 8, 2: 16, 1: 32}.get(itemsize, 8)           # packed sublane multiple

    # Lane-dense 2D view: each sample becomes [rows_per_sample, nc] with nc a
    # multiple of 128 when possible (contiguous reshape -> no HBM copy).
    nc = next((c for c in (512, 256, 128) if N % c == 0), None)
    if nc is None:
        # Awkward feature size: keep the full (non-128-multiple) feature dim as
        # the lane axis.  Full-extent last-dim blocks are legal (masked stores)
        # and avoid the old jnp.pad + slice extra HBM passes.
        nc = N
        rows_per_sample = 1
    else:
        rows_per_sample = N // nc
    R = B * rows_per_sample
    x2 = x.reshape(R, nc)

    # Row tile sized from a ~target_block_bytes-per-input-block budget, rounded
    # to the dtype's packed sublane multiple; never larger than the row count.
    tm_budget = max(sub, (target_block_bytes // max(1, nc * itemsize)) // sub * sub)
    if R <= sub:
        tm_eff = R                                        # exact full-extent rows
    else:
        tm_eff = min(tm_budget, _round_up(R, sub))
        if pl.cdiv(R, tm_eff) < 2:
            # Guarantee >=2 tiles so ("parallel",) engages both v7x TCs.
            tm_eff = _round_up(pl.cdiv(R, 2), sub)
    grid = (pl.cdiv(R, tm_eff),)
    num_tiles = grid[0]

    # Per-row scale, zero-padded to a whole number of tiles and kept resident
    # in VMEM (constant index_map) -> no per-step scale DMA.
    R_pad = num_tiles * tm_eff
    scale_rows = jnp.repeat(scale, rows_per_sample)
    if R_pad > R:
        scale_rows = jnp.pad(scale_rows, (0, R_pad - R))  # tiny (R_pad,) array
    scale_rows = scale_rows.reshape(R_pad, 1)

    kernel = functools.partial(_drop_path_kernel, tm=tm_eff)

    out = pl.pallas_call(
        kernel,
        out_shape=jax.ShapeDtypeStruct((R, nc), x.dtype),
        grid=grid,
        in_specs=[
            pl.BlockSpec((tm_eff, nc), lambda i: (i, 0)),     # x rows (streamed)
            pl.BlockSpec((R_pad, 1), lambda i: (0, 0)),       # resident scale
        ],
        out_specs=pl.BlockSpec((tm_eff, nc), lambda i: (i, 0)),
        compiler_params=pltpu.CompilerParams(
            dimension_semantics=("parallel",),
            vmem_limit_bytes=32 * 1024 * 1024),
        cost_estimate=pl.CostEstimate(
            flops=R * nc,
            transcendentals=0,
            bytes_accessed=2 * R * nc * itemsize + 4 * R_pad),
    )(x2, scale_rows)

    return out.reshape(orig_shape)


def _reference(x, drop_prob, key):
    """Pure-JAX reference mirroring the PyTorch drop_path_f (training=True)."""
    keep_prob = 1.0 - drop_prob
    B = x.shape[0]
    u = jax.random.uniform(key, (B,), dtype=jnp.float32)
    scale = (jnp.floor(keep_prob + u) / keep_prob).astype(x.dtype)
    bshape = (B,) + (1,) * (x.ndim - 1)
    return x * scale.reshape(bshape)


if __name__ == "__main__":
    key = jax.random.PRNGKey(0)
    kx, kd, kx2 = jax.random.split(key, 3)
    drop_prob = 0.25

    # Swin-style token tensor: [B, L, C] = [4, 64, 32] (lane-dense fast path).
    B, L, C = 4, 64, 32
    x = jax.random.normal(kx, (B, L, C), dtype=jnp.float32)
    out = drop_path(x, drop_prob, training=True, key=kd)
    out = jax.block_until_ready(out)
    ref = _reference(x, drop_prob, kd)
    np.testing.assert_allclose(np.asarray(out), np.asarray(ref), rtol=1e-6, atol=1e-6)
    assert out.shape == x.shape

    # Awkward feature size (not a multiple of 128): full-extent lane path,
    # no padding / slicing round trips.  Still exact for f32 (single multiply).
    xa = jax.random.normal(kx2, (4, 7, 9), dtype=jnp.float32)
    out_a = jax.block_until_ready(drop_path(xa, drop_prob, training=True, key=kd))
    np.testing.assert_allclose(np.asarray(out_a), np.asarray(_reference(xa, drop_prob, kd)),
                               rtol=1e-6, atol=1e-6)

    # Eval / p == 0 path is the identity, exactly like the PyTorch module.
    out_eval = drop_path(x, drop_prob, training=False, key=kd)
    np.testing.assert_allclose(np.asarray(out_eval), np.asarray(x))
    out_p0 = drop_path(x, 0.0, training=True, key=kd)
    np.testing.assert_allclose(np.asarray(out_p0), np.asarray(x))

    print("KERNEL_OK")
</pallas_src>

<mosaic_0001>
module attributes {stable_mosaic.version = 11 : i64} {
  func.func @_drop_path_kernel(%arg0: i32, %arg1: memref<8x512xf32, #tpu.memory_space<vmem>>, %arg2: memref<16x1xf32, #tpu.memory_space<vmem>>, %arg3: memref<8x512xf32, #tpu.memory_space<vmem>>) attributes {dimension_semantics = [#tpu.dimension_semantics<parallel>], iteration_bounds = array<i64: 2>, scalar_prefetch = 0 : i64, scratch_operands = 0 : i64, tpu.core_type = #tpu.core_type<tc>, window_params = [{transform_indices = @transform_0, window_bounds = array<i64: 8, 512>}, {pipeline_mode = #tpu.pipeline_mode<synchronous>, transform_indices = @transform_1, window_bounds = array<i64: 16, 1>}, {transform_indices = @transform_2, window_bounds = array<i64: 8, 512>}]} {
    %c8_i32 = arith.constant 8 : i32
    %0 = arith.muli %arg0, %c8_i32 : i32
    %1 = tpu.assume_multiple %0, 8 : i32
    %2 = arith.index_cast %1 : i32 to index
    %c0 = arith.constant 0 : index
    %3 = vector.load %arg2[%2, %c0] : memref<16x1xf32, #tpu.memory_space<vmem>>, vector<8x1xf32>
    %c0_0 = arith.constant 0 : index
    %c0_1 = arith.constant 0 : index
    %4 = vector.load %arg1[%c0_0, %c0_1] : memref<8x512xf32, #tpu.memory_space<vmem>>, vector<8x512xf32>
    %5 = vector.broadcast %3 : vector<8x1xf32> to vector<8x512xf32>
    %6 = arith.mulf %4, %5 : vector<8x512xf32>
    %c0_2 = arith.constant 0 : index
    %c0_3 = arith.constant 0 : index
    %7 = vector.load %arg3[%c0_2, %c0_3] : memref<8x512xf32, #tpu.memory_space<vmem>>, vector<8x512xf32>
    tpu.vector_store %arg3[%c0_2, %c0_3], %6 {strides = array<i32>} : memref<8x512xf32, #tpu.memory_space<vmem>>, vector<8x512xf32>,
    return
  }
  func.func @transform_0(%arg0: i32) -> (i32, i32) {
    %c0_i32 = arith.constant 0 : i32
    %c0_i32_0 = arith.constant 0 : i32
    return %arg0, %c0_i32 : i32, i32
  }
  func.func @transform_1(%arg0: i32) -> (i32, i32) {
    %c0_i32 = arith.constant 0 : i32
    %c0_i32_0 = arith.constant 0 : i32
    %c0_i32_1 = arith.constant 0 : i32
    return %c0_i32, %c0_i32_0 : i32, i32
  }
  func.func @transform_2(%arg0: i32) -> (i32, i32) {
    %c0_i32 = arith.constant 0 : i32
    %c0_i32_0 = arith.constant 0 : i32
    return %arg0, %c0_i32 : i32, i32
  }
}

</mosaic_0001>

<llo_original>
// kernel: tpu_custom_call.1
$region0: #{tpu_custom_call.1}
  #allocation0 [shape = 'u32[]', space=smem, size = 0x4, offset = 0x4, fixed_abs, tag = 'smem constant byte address 0x4 - core index']
  #allocation1 [shape = 'u32[72,128]{1,0:T(1,128)}', space=vmem, size = 0x9000, scoped, tag = 'internal scratch']
  %s0 = inlined_call_operand.hbm [shape: f32[16,512], index: 0, kind: input, shape index: {}]
  %s1 = inlined_call_operand.vmem [shape: f32[16,1], index: 1, kind: input, shape index: {}]
  %s2 = inlined_call_operand.hbm [shape: f32[16,512], index: 2, kind: output, shape index: {}]
  %s3 = sld [smem:[#allocation0]]
  $region45: #{tpu_custom_call.1} parent=0
    _
  %s5 = ssub.s32 1, %s3
  %s6 = scalar_select 0, %s5, %s3
  $region1: #{tpu_custom_call.1} parent=0
    #allocation2 [shape = 'u8[32768]{0}', space=vmem, size = 0x8000, scoped, tag = 'input window, operand 0']
    #allocation3 [shape = 's32[2]{0}', space=sflag, size = 0x8, scoped, tag = 'scoped memory for tpu_custom_call.1']
    #allocation4 [shape = 's32[2]{0}', space=sflag, size = 0x8, scoped, tag = 'scoped memory for tpu_custom_call.1']
    #allocation5 [shape = 'u8[32768]{0}', space=vmem, size = 0x8000, scoped, tag = 'output window, operand 0']
    %7 = vsyncpa [#allocation3], 0
    %s8 = scalar_lea.sflag [#allocation3], 1
    %9 = vsyncpa %s8, 0
    %10 = vsyncpa [#allocation4], 0
    %s11 = scalar_lea.sflag [#allocation4], 1
    %12 = vsyncpa %s11, 0
    loop: start=0, step=1, limit=4
    $region2: #{tpu_custom_call.1} parent=1 // loop_pre_header
      _
    $region3: #{tpu_custom_call.1} parent=1 // loop_header
      %s14 = sphi 0, %s18
      %p15 = scmp.ge.s32.totalorder %s14, 4
      %s24 = sphi 0, %s26
      %s27 = sphi 0, %s24
      %s28 = sphi 0, %s27
      %s44 = sphi 0, %s28
      %s48 = sphi 0, %s48
      %s50 = sphi 0, %s48
      %s51 = sphi 0, %s50
      %s65 = sphi 0, %s51
      %s71 = sphi 0, %s73
      %s74 = sphi 0, %s71
      %s75 = sphi 0, %s74
      %s91 = sphi 0, %s75
    $region4: #{tpu_custom_call.1} parent=1 // loop_header_branch
      %17 = sbr.rel (%p15) target = $region8
    $region5: #{tpu_custom_call.1} parent=1 // loop_body
      %s19 = ssub.s32 %s14, 1
      %s20 = ssub.s32 %s14, 2
      %s21 = sadd.s32 %s14, 1
      %s22 = ssub.s32 %s14, %s21
      %p23 = scmp.eq.s32.totalorder %s22, 0
      %s25 = sadd.s32 %s24, 1
      %s26 = scalar_select %p23, %s24, %s25
      %p29 = pneg %p23
      %p30 = scmp.eq.s32.totalorder %s14, 1
      %p31 = por %p29, %p30
      %p32 = scmp.ne.s32.totalorder %s24, %s27
      %p33 = scmp.eq.s32.totalorder %s14, 0
      %p34 = por %p32, %p33
      %p35 = scmp.ne.s32.totalorder %s24, %s27
      %p36 = scmp.eq.s32.totalorder %s19, 1
      %p37 = por %p35, %p36
      %p38 = scmp.ne.s32.totalorder %s27, %s28
      %p39 = scmp.eq.s32.totalorder %s19, 0
      %p40 = por %p38, %p39
      %p41 = scmp.ne.s32.totalorder %s27, %s28
      %p42 = scmp.eq.s32.totalorder %s20, 1
      %p43 = por %p41, %p42
      %p45 = scmp.ne.s32.totalorder %s28, %s44
      %p46 = scmp.eq.s32.totalorder %s20, 0
      %p47 = por %p45, %p46
      %s49 = sadd.s32 %s48, 1
      %p52 = scmp.eq.s32.totalorder %s14, 1
      %p53 = scmp.ne.s32.totalorder %s48, %s50
      %p54 = scmp.eq.s32.totalorder %s14, 0
      %p55 = por %p53, %p54
      %p56 = scmp.ne.s32.totalorder %s48, %s50
      %p57 = scmp.eq.s32.totalorder %s19, 1
      %p58 = por %p56, %p57
      %p59 = scmp.ne.s32.totalorder %s50, %s51
      %p60 = scmp.eq.s32.totalorder %s19, 0
      %p61 = por %p59, %p60
      %p62 = scmp.ne.s32.totalorder %s50, %s51
      %p63 = scmp.eq.s32.totalorder %s20, 1
      %p64 = por %p62, %p63
      %p66 = scmp.ne.s32.totalorder %s51, %s65
      %p67 = scmp.eq.s32.totalorder %s20, 0
      %p68 = por %p66, %p67
      %s69 = ssub.s32 %s14, %s21
      %p70 = scmp.eq.s32.totalorder %s69, 0
      %s72 = sadd.s32 %s71, 1
      %s73 = scalar_select %p70, %s71, %s72
      %p76 = pneg %p70
      %p77 = scmp.eq.s32.totalorder %s14, 1
      %p78 = por %p76, %p77
      %p79 = scmp.ne.s32.totalorder %s71, %s74
      %p80 = scmp.eq.s32.totalorder %s14, 0
      %p81 = por %p79, %p80
      %p82 = scmp.ne.s32.totalorder %s71, %s74
      %p83 = scmp.eq.s32.totalorder %s19, 1
      %p84 = por %p82, %p83
      %p85 = scmp.ne.s32.totalorder %s74, %s75
      %p86 = scmp.eq.s32.totalorder %s19, 0
      %p87 = por %p85, %p86
      %p88 = scmp.ne.s32.totalorder %s74, %s75
      %p89 = scmp.eq.s32.totalorder %s20, 1
      %p90 = por %p88, %p89
      %p92 = scmp.ne.s32.totalorder %s75, %s91
      %p93 = scmp.eq.s32.totalorder %s20, 0
      %p94 = por %p92, %p93
      %p95 = scmp.le.s32.totalorder 1, %s14
      %p96 = scmp.lt.s32.totalorder %s14, 3
      %p97 = pnand %p95, %p96
      %p98 = pneg %p97
      // Predicated region
      $region9: #{tpu_custom_call.1} parent=5 // pred_check
        _
      $region10: #{tpu_custom_call.1} parent=5 // pred_check_branch
        %100 = sbr.rel (%p97) target = $region12
      $region11: #{tpu_custom_call.1} parent=5 // pred_region
        %s101 = ssub.s32 %s14, 1
        // Predicated region
        $region13: #{tpu_custom_call.1} parent=11 // pred_check
          %p102 = pneg %p61
        $region14: #{tpu_custom_call.1} parent=11 // pred_check_branch
          %104 = sbr.rel (%p102) target = $region16
        $region15: #{tpu_custom_call.1} parent=11 // pred_region
          _
        $region16: #{tpu_custom_call.1} parent=11 // pred_fallthru
          _
      $region12: #{tpu_custom_call.1} parent=5 // pred_fallthru
        _
      %p105 = scmp.lt.s32.totalorder %s14, 2
      // Predicated region
      $region17: #{tpu_custom_call.1} parent=5 // pred_check
        %p106 = pneg %p105
      $region18: #{tpu_custom_call.1} parent=5 // pred_check_branch
        %108 = sbr.rel (%p106) target = $region20
      $region19: #{tpu_custom_call.1} parent=5 // pred_region
        // Predicated region
        $region21: #{tpu_custom_call.1} parent=19 // pred_check
          %p109 = pneg %p34
        $region22: #{tpu_custom_call.1} parent=19 // pred_check_branch
          %111 = sbr.rel (%p109) target = $region24
        $region23: #{tpu_custom_call.1} parent=19 // pred_region
          %s112 = sand.u32 %s24, 1
          %s113 = scalar_lea.sflag [#allocation3], %s112
          %s114 = sand.u32 %s24, 1
          %s115 = smul.addr %s114, 32
          %s116 = scalar_lea.vmem [#allocation2], %s115
          %118 = vsyncadd %s113, 0
          %s119 = smul.addr %s14, 4
          %s120 = smul.addr %s119, 8
          %s121 = scalar_lea.hbm %s0, %s120
          %s123 = sshll.u32 %s121, 4
          %s124 = int_to_ptr.hbm [resolvable:$true] %s123
          %s125 = sshll.u32 %s116, 4
          %s126 = int_to_ptr.vmem [resolvable:$true] %s125
          %128 = dma.hbm_to_vmem [thread:$0]  %s124, 512, %s126, %s113
        $region24: #{tpu_custom_call.1} parent=19 // pred_fallthru
          _
      $region20: #{tpu_custom_call.1} parent=5 // pred_fallthru
        _
      %p129 = scmp.le.s32.totalorder 1, %s14
      %p130 = scmp.lt.s32.totalorder %s14, 3
      %p131 = pnand %p129, %p130
      %p132 = pneg %p131
      // Predicated region
      $region25: #{tpu_custom_call.1} parent=5 // pred_check
        _
      $region26: #{tpu_custom_call.1} parent=5 // pred_check_branch
        %134 = sbr.rel (%p131) target = $region28
      $region27: #{tpu_custom_call.1} parent=5 // pred_region
        %s135 = ssub.s32 %s14, 1
        %s136 = sand.u32 %s27, 1
        %s137 = scalar_lea.sflag [#allocation3], %s136
        %s138 = sand.u32 %s27, 1
        %s139 = smul.addr %s138, 32
        %s140 = scalar_lea.vmem [#allocation2], %s139
        // Predicated region
        $region29: #{tpu_custom_call.1} parent=27 // pred_check
          %p141 = pneg %p40
        $region30: #{tpu_custom_call.1} parent=27 // pred_check_branch
          %143 = sbr.rel (%p141) target = $region32
        $region31: #{tpu_custom_call.1} parent=27 // pred_region
          %145 = dma.done %s137, 512
        $region32: #{tpu_custom_call.1} parent=27 // pred_fallthru
          _
        %s146 = sand.u32 %s27, 1
        %s147 = scalar_lea.sflag [#allocation3], %s146
        %s148 = sand.u32 %s27, 1
        %s149 = smul.addr %s148, 32
        %s150 = scalar_lea.vmem [#allocation2], %s149
        %p151 = pneg %p40
        %p152 = pneg %p37
        %p153 = pneg %p61
        %p154 = pneg %p58
        %p155 = pneg %p87
        %p156 = pneg %p84
        %s157 = sand.u32 %s74, 1
        %s158 = scalar_lea.sflag [#allocation4], %s157
        %s159 = sand.u32 %s74, 1
        %s160 = smul.addr %s159, 32
        %s161 = scalar_lea.vmem [#allocation5], %s160
        %s162 = smul.u32 %s19, 8
        %s163 = scalar_lea.vmem %s1, %s162
        %v164 = vld [vmem:[%s163] sm:$0xff]
        %v165 = vld [vmem:[%s140] sm:$0xff]
        %v166 = vld [vmem:[%s140 + $0x8] sm:$0xff]
        %v167 = vld [vmem:[%s140 + $0x10] sm:$0xff]
        %v168 = vld [vmem:[%s140 + $0x18] sm:$0xff]
        %170 = vset.pattern.permute.xlu0 0
        %171 = vperm.xlu0 %170, %v164
        %v172 = vpop.permute.xlu0 %171
        %v174 = vmul.f32 %v165, %v172
        %v175 = vmul.f32 %v166, %v172
        %v176 = vmul.f32 %v167, %v172
        %v177 = vmul.f32 %v168, %v172
        %178 = vst [vmem:[%s161] sm:$0xff] %v174
        %179 = vst [vmem:[%s161 + $0x8] sm:$0xff] %v175
        %180 = vst [vmem:[%s161 + $0x10] sm:$0xff] %v176
        %181 = vst [vmem:[%s161 + $0x18] sm:$0xff] %v177
        %s182 = sand.u32 %s74, 1
        %s183 = scalar_lea.sflag [#allocation4], %s182
        %s184 = sand.u32 %s74, 1
        %s185 = smul.addr %s184, 32
        %s186 = scalar_lea.vmem [#allocation5], %s185
        // Predicated region
        $region33: #{tpu_custom_call.1} parent=27 // pred_check
          %p187 = pneg %p84
        $region34: #{tpu_custom_call.1} parent=27 // pred_check_branch
          %189 = sbr.rel (%p187) target = $region36
        $region35: #{tpu_custom_call.1} parent=27 // pred_region
          %191 = vsyncadd %s183, 0
          %s192 = smul.addr %s19, 4
          %s193 = smul.addr %s192, 8
          %s194 = scalar_lea.hbm %s2, %s193
          %s196 = sshll.u32 %s186, 4
          %s197 = int_to_ptr.vmem [resolvable:$true] %s196
          %s198 = sshll.u32 %s194, 4
          %s199 = int_to_ptr.hbm [resolvable:$true] %s198
          %201 = dma.vmem_to_hbm [thread:$0]  %s197, 512, %s199, %s183
        $region36: #{tpu_custom_call.1} parent=27 // pred_fallthru
          _
      $region28: #{tpu_custom_call.1} parent=5 // pred_fallthru
        _
      %p202 = scmp.le.s32.totalorder 2, %s14
      // Predicated region
      $region37: #{tpu_custom_call.1} parent=5 // pred_check
        %p203 = pneg %p202
      $region38: #{tpu_custom_call.1} parent=5 // pred_check_branch
        %205 = sbr.rel (%p203) target = $region40
      $region39: #{tpu_custom_call.1} parent=5 // pred_region
        %s206 = ssub.s32 %s14, 2
        // Predicated region
        $region41: #{tpu_custom_call.1} parent=39 // pred_check
          %p207 = pneg %p90
        $region42: #{tpu_custom_call.1} parent=39 // pred_check_branch
          %209 = sbr.rel (%p207) target = $region44
        $region43: #{tpu_custom_call.1} parent=39 // pred_region
          %s210 = sand.u32 %s75, 1
          %s211 = scalar_lea.sflag [#allocation4], %s210
          %s212 = sand.u32 %s75, 1
          %s213 = smul.addr %s212, 32
          %s214 = scalar_lea.vmem [#allocation5], %s213
          %216 = dma.done %s211, 512
        $region44: #{tpu_custom_call.1} parent=39 // pred_fallthru
          _
      $region40: #{tpu_custom_call.1} parent=5 // pred_fallthru
        _
    $region6: #{tpu_custom_call.1} parent=1 // loop_footer
      %s18 = sadd.s32 1, %s14
    $region7: #{tpu_custom_call.1} parent=1 // loop_footer_branch
      %13 = sbr.rel target = $region3
    $region8: #{tpu_custom_call.1} parent=1 // loop_exit
      _
    %217 = vsyncpa [#allocation3], 1
    %s218 = scalar_lea.sflag [#allocation3], 1
    %219 = vsyncpa %s218, 1
    %220 = vsyncpa [#allocation4], 1
    %s221 = scalar_lea.sflag [#allocation4], 1
    %222 = vsyncpa %s221, 1

</llo_original>
